<compile_context>
chip_gen: v6e
topology: v6e:2x2x1
jax: 0.10.0
libtpu: 0.0.40
codegen_flags: <defaults>
</compile_context>

<pallas_src>
import functools
import math

import jax
import jax.numpy as jnp
from jax.experimental import pallas as pl
from jax.experimental.pallas import tpu as pltpu


def _fusion_kernel(x_ref, y_ref, wx_ref, wy_ref, b_ref, o_ref, *, fold, d):
    """out = z*x + (1-z)*y with z = sigmoid(<x,w_x> + <y,w_y> + b) per original row.

    x_ref / y_ref / o_ref : (TM, fold*d) tiles; each folded row packs `fold`
                            original length-d rows side by side (lane-dense).
    wx_ref / wy_ref       : (1, fold*d) f32 weights, already tiled across folds.
    b_ref                 : (1,) f32 bias scalar in SMEM.
    """
    xf = x_ref[...].astype(jnp.float32)           # gate + blend math in f32
    yf = y_ref[...].astype(jnp.float32)
    wx = wx_ref[...]                              # (1, W) f32
    wy = wy_ref[...]
    b = b_ref[0]

    # single fused elementwise pass feeding the lane reduction(s)
    p = xf * wx + yf * wy                         # (TM, W) f32
    diff = xf - yf                                # reused by the lerp-form blend

    if fold == 1:
        logit = jnp.sum(p, axis=-1, keepdims=True) + b         # (TM, 1)
        z = jax.nn.sigmoid(logit)                               # broadcasts over lanes
        o_ref[...] = (yf + z * diff).astype(o_ref.dtype)
    else:
        w = fold * d
        # segmented reduction: segment s (lanes [s*d, (s+1)*d)) is one original row
        lane = jax.lax.broadcasted_iota(jnp.int32, (1, w), 1)
        zb = jnp.zeros(p.shape, jnp.float32)
        for s in range(fold):                                   # fold is small & static
            mask = jnp.logical_and(lane >= s * d, lane < (s + 1) * d)   # (1, W)
            logit_s = jnp.sum(jnp.where(mask, p, 0.0), axis=-1, keepdims=True) + b
            zb = jnp.where(mask, jax.nn.sigmoid(logit_s), zb)   # gate into its segment
        o_ref[...] = (yf + zb * diff).astype(o_ref.dtype)       # z*x + (1-z)*y


def fusion(x, y, weight, bias, *, target_block_bytes=2 * 1024 * 1024):
    """x, y: (..., D); weight: (1, 2D) [nn.Linear(2D,1).weight]; bias: (1,)."""
    assert x.shape == y.shape
    orig_shape = x.shape
    d = orig_shape[-1]
    n = 1
    for s in orig_shape[:-1]:
        n *= int(s)
    if n == 0:
        return x

    # ---- lane-dense folding factor (must divide n so the reshape is free) ----
    if d % 128 == 0:
        fold = 1
    else:
        fold = min(128 // math.gcd(d, 128), 16)   # power of two
        while n % fold:
            fold //= 2
    w = fold * d
    nf = n // fold

    x2 = x.reshape(nf, w)                         # contiguous -> free reshape
    y2 = y.reshape(nf, w)

    # ---- row tile: ~2 MiB per stream, aligned to the dtype's sublane packing ----
    itemsize = jnp.dtype(x.dtype).itemsize
    sublane = 8 * max(1, 4 // itemsize)           # f32 -> 8, bf16 -> 16, int8 -> 32
    tm = max(1, target_block_bytes // (w * itemsize))
    tm = min(tm, nf)
    if tm < nf:
        tm = max(sublane, (tm // sublane) * sublane)
        if tm > nf:
            tm = nf                               # single block == full dim (always legal)
    grid = pl.cdiv(nf, tm)                        # remainder handled by Pallas masking

    w_x = jnp.tile(weight[:, :d].astype(jnp.float32), (1, fold))   # (1, W)
    w_y = jnp.tile(weight[:, d:].astype(jnp.float32), (1, fold))   # (1, W)
    b = bias.reshape(1).astype(jnp.float32)                        # (1,) -> SMEM

    kernel = functools.partial(_fusion_kernel, fold=fold, d=d)

    out = pl.pallas_call(
        kernel,
        out_shape=jax.ShapeDtypeStruct((nf, w), x.dtype),
        grid_spec=pltpu.PrefetchScalarGridSpec(
            num_scalar_prefetch=0,
            grid=(grid,),
            in_specs=[
                pl.BlockSpec((tm, w), lambda i: (i, 0)),       # x rows
                pl.BlockSpec((tm, w), lambda i: (i, 0)),       # y rows
                pl.BlockSpec((1, w), lambda i: (0, 0)),        # w_x (resident)
                pl.BlockSpec((1, w), lambda i: (0, 0)),        # w_y (resident)
                pl.BlockSpec(memory_space=pltpu.SMEM),         # bias scalar
            ],
            out_specs=pl.BlockSpec((tm, w), lambda i: (i, 0)),
        ),
        compiler_params=pltpu.CompilerParams(
            dimension_semantics=("parallel",),                 # shard grid across TCs
            vmem_limit_bytes=48 * 1024 * 1024,
        ),
    )(x2, y2, w_x, w_y, b)

    return out.reshape(orig_shape)


def fusion_ref(x, y, weight, bias):
    conc = jnp.concatenate((x, y), axis=-1)
    z = jax.nn.sigmoid(conc @ weight.T + bias)
    return z * x + (1.0 - z) * y


if __name__ == "__main__":
    key = jax.random.PRNGKey(0)
    B, S, D = 2, 8, 32
    k1, k2, k3, k4 = jax.random.split(key, 4)

    x = jax.random.normal(k1, (B, S, D), dtype=jnp.float32)
    y = jax.random.normal(k2, (B, S, D), dtype=jnp.float32)
    # nn.Linear(2*dim, 1): weight (1, 2*dim), bias (1,) -- deterministic synthetic init
    bound = 1.0 / math.sqrt(2.0 * D)
    weight = jax.random.uniform(k3, (1, 2 * D), minval=-bound, maxval=bound,
                                dtype=jnp.float32)
    bias = jax.random.uniform(k4, (1,), minval=-bound, maxval=bound,
                              dtype=jnp.float32)

    out = fusion(x, y, weight, bias)
    out = jax.block_until_ready(out)

    ref = fusion_ref(x, y, weight, bias)
    assert out.shape == x.shape
    assert jnp.allclose(out, ref, atol=1e-5, rtol=1e-5), "mismatch vs reference"
    print("KERNEL_OK")
</pallas_src>

<mosaic_0001>
module attributes {stable_mosaic.version = 11 : i64} {
  func.func @_fusion_kernel(%arg0: i32, %arg1: memref<4x128xf32, #tpu.memory_space<vmem>>, %arg2: memref<4x128xf32, #tpu.memory_space<vmem>>, %arg3: memref<1x128xf32, #tpu.memory_space<vmem>>, %arg4: memref<1x128xf32, #tpu.memory_space<vmem>>, %arg5: memref<1xf32, #tpu.memory_space<smem>>, %arg6: memref<4x128xf32, #tpu.memory_space<vmem>>) attributes {dimension_semantics = [#tpu.dimension_semantics<parallel>], iteration_bounds = array<i64: 1>, scalar_prefetch = 0 : i64, scratch_operands = 0 : i64, tpu.core_type = #tpu.core_type<tc>, window_params = [{transform_indices = @transform_0, window_bounds = array<i64: 4, 128>}, {transform_indices = @transform_1, window_bounds = array<i64: 4, 128>}, {pipeline_mode = #tpu.pipeline_mode<synchronous>, transform_indices = @transform_2, window_bounds = array<i64: 1, 128>}, {pipeline_mode = #tpu.pipeline_mode<synchronous>, transform_indices = @transform_3, window_bounds = array<i64: 1, 128>}, {transform_indices = @transform_4, window_bounds = array<i64: 1>}, {transform_indices = @transform_5, window_bounds = array<i64: 4, 128>}]} {
    %c0 = arith.constant 0 : index
    %c0_0 = arith.constant 0 : index
    %0 = vector.load %arg1[%c0, %c0_0] : memref<4x128xf32, #tpu.memory_space<vmem>>, vector<4x128xf32>
    %c0_1 = arith.constant 0 : index
    %c0_2 = arith.constant 0 : index
    %1 = vector.load %arg2[%c0_1, %c0_2] : memref<4x128xf32, #tpu.memory_space<vmem>>, vector<4x128xf32>
    %c0_3 = arith.constant 0 : index
    %c0_4 = arith.constant 0 : index
    %2 = vector.load %arg3[%c0_3, %c0_4] : memref<1x128xf32, #tpu.memory_space<vmem>>, vector<1x128xf32>
    %c0_5 = arith.constant 0 : index
    %c0_6 = arith.constant 0 : index
    %3 = vector.load %arg4[%c0_5, %c0_6] : memref<1x128xf32, #tpu.memory_space<vmem>>, vector<1x128xf32>
    %c0_7 = arith.constant 0 : index
    %4 = memref.load %arg5[%c0_7] : memref<1xf32, #tpu.memory_space<smem>>
    %5 = vector.broadcast %2 : vector<1x128xf32> to vector<4x128xf32>
    %6 = arith.mulf %0, %5 : vector<4x128xf32>
    %7 = vector.broadcast %3 : vector<1x128xf32> to vector<4x128xf32>
    %8 = arith.mulf %1, %7 : vector<4x128xf32>
    %9 = arith.addf %6, %8 : vector<4x128xf32>
    %10 = arith.subf %0, %1 : vector<4x128xf32>
    %11 = tpu.iota {dimensions = array<i32: 1>} : vector<1x128xi32>
    %cst = arith.constant 0.000000e+00 : f32
    %12 = vector.broadcast %cst : f32 to vector<4x128xf32>
    %c0_i32 = arith.constant 0 : i32
    %13 = vector.broadcast %c0_i32 : i32 to vector<1x128xi32>
    %14 = arith.cmpi sge, %11, %13 : vector<1x128xi32>
    %c32_i32 = arith.constant 32 : i32
    %15 = vector.broadcast %c32_i32 : i32 to vector<1x128xi32>
    %16 = arith.cmpi slt, %11, %15 : vector<1x128xi32>
    %17 = arith.andi %14, %16 : vector<1x128xi1>
    %cst_8 = arith.constant 0.000000e+00 : f32
    %18 = vector.shape_cast %17 : vector<1x128xi1> to vector<1x128xi1>
    %19 = vector.broadcast %18 : vector<1x128xi1> to vector<4x128xi1>
    %20 = vector.broadcast %cst_8 : f32 to vector<4x128xf32>
    %21 = arith.select %19, %9, %20 : vector<4x128xi1>, vector<4x128xf32>
    %cst_9 = arith.constant dense<0.000000e+00> : vector<4xf32>
    %22 = vector.multi_reduction <add>, %21, %cst_9 [1] : vector<4x128xf32> to vector<4xf32>
    %23 = vector.shape_cast %22 : vector<4xf32> to vector<4x1xf32>
    %24 = vector.broadcast %4 : f32 to vector<4x1xf32>
    %25 = arith.addf %23, %24 : vector<4x1xf32>
    %26 = arith.negf %25 : vector<4x1xf32>
    %27 = math.exp %26 : vector<4x1xf32>
    %cst_10 = arith.constant 1.000000e+00 : f32
    %28 = vector.broadcast %cst_10 : f32 to vector<4x1xf32>
    %29 = arith.addf %28, %27 : vector<4x1xf32>
    %30 = arith.divf %28, %29 : vector<4x1xf32>
    %31 = vector.shape_cast %17 : vector<1x128xi1> to vector<1x128xi1>
    %32 = vector.broadcast %31 : vector<1x128xi1> to vector<4x128xi1>
    %33 = vector.shape_cast %30 : vector<4x1xf32> to vector<4x1xf32>
    %34 = vector.broadcast %33 : vector<4x1xf32> to vector<4x128xf32>
    %35 = arith.select %32, %34, %12 : vector<4x128xi1>, vector<4x128xf32>
    %c32_i32_11 = arith.constant 32 : i32
    %36 = vector.broadcast %c32_i32_11 : i32 to vector<1x128xi32>
    %37 = arith.cmpi sge, %11, %36 : vector<1x128xi32>
    %c64_i32 = arith.constant 64 : i32
    %38 = vector.broadcast %c64_i32 : i32 to vector<1x128xi32>
    %39 = arith.cmpi slt, %11, %38 : vector<1x128xi32>
    %40 = arith.andi %37, %39 : vector<1x128xi1>
    %cst_12 = arith.constant 0.000000e+00 : f32
    %41 = vector.shape_cast %40 : vector<1x128xi1> to vector<1x128xi1>
    %42 = vector.broadcast %41 : vector<1x128xi1> to vector<4x128xi1>
    %43 = vector.broadcast %cst_12 : f32 to vector<4x128xf32>
    %44 = arith.select %42, %9, %43 : vector<4x128xi1>, vector<4x128xf32>
    %cst_13 = arith.constant dense<0.000000e+00> : vector<4xf32>
    %45 = vector.multi_reduction <add>, %44, %cst_13 [1] : vector<4x128xf32> to vector<4xf32>
    %46 = vector.shape_cast %45 : vector<4xf32> to vector<4x1xf32>
    %47 = vector.broadcast %4 : f32 to vector<4x1xf32>
    %48 = arith.addf %46, %47 : vector<4x1xf32>
    %49 = arith.negf %48 : vector<4x1xf32>
    %50 = math.exp %49 : vector<4x1xf32>
    %cst_14 = arith.constant 1.000000e+00 : f32
    %51 = vector.broadcast %cst_14 : f32 to vector<4x1xf32>
    %52 = arith.addf %51, %50 : vector<4x1xf32>
    %53 = arith.divf %51, %52 : vector<4x1xf32>
    %54 = vector.shape_cast %40 : vector<1x128xi1> to vector<1x128xi1>
    %55 = vector.broadcast %54 : vector<1x128xi1> to vector<4x128xi1>
    %56 = vector.shape_cast %53 : vector<4x1xf32> to vector<4x1xf32>
    %57 = vector.broadcast %56 : vector<4x1xf32> to vector<4x128xf32>
    %58 = arith.select %55, %57, %35 : vector<4x128xi1>, vector<4x128xf32>
    %c64_i32_15 = arith.constant 64 : i32
    %59 = vector.broadcast %c64_i32_15 : i32 to vector<1x128xi32>
    %60 = arith.cmpi sge, %11, %59 : vector<1x128xi32>
    %c96_i32 = arith.constant 96 : i32
    %61 = vector.broadcast %c96_i32 : i32 to vector<1x128xi32>
    %62 = arith.cmpi slt, %11, %61 : vector<1x128xi32>
    %63 = arith.andi %60, %62 : vector<1x128xi1>
    %cst_16 = arith.constant 0.000000e+00 : f32
    %64 = vector.shape_cast %63 : vector<1x128xi1> to vector<1x128xi1>
    %65 = vector.broadcast %64 : vector<1x128xi1> to vector<4x128xi1>
    %66 = vector.broadcast %cst_16 : f32 to vector<4x128xf32>
    %67 = arith.select %65, %9, %66 : vector<4x128xi1>, vector<4x128xf32>
    %cst_17 = arith.constant dense<0.000000e+00> : vector<4xf32>
    %68 = vector.multi_reduction <add>, %67, %cst_17 [1] : vector<4x128xf32> to vector<4xf32>
    %69 = vector.shape_cast %68 : vector<4xf32> to vector<4x1xf32>
    %70 = vector.broadcast %4 : f32 to vector<4x1xf32>
    %71 = arith.addf %69, %70 : vector<4x1xf32>
    %72 = arith.negf %71 : vector<4x1xf32>
    %73 = math.exp %72 : vector<4x1xf32>
    %cst_18 = arith.constant 1.000000e+00 : f32
    %74 = vector.broadcast %cst_18 : f32 to vector<4x1xf32>
    %75 = arith.addf %74, %73 : vector<4x1xf32>
    %76 = arith.divf %74, %75 : vector<4x1xf32>
    %77 = vector.shape_cast %63 : vector<1x128xi1> to vector<1x128xi1>
    %78 = vector.broadcast %77 : vector<1x128xi1> to vector<4x128xi1>
    %79 = vector.shape_cast %76 : vector<4x1xf32> to vector<4x1xf32>
    %80 = vector.broadcast %79 : vector<4x1xf32> to vector<4x128xf32>
    %81 = arith.select %78, %80, %58 : vector<4x128xi1>, vector<4x128xf32>
    %c96_i32_19 = arith.constant 96 : i32
    %82 = vector.broadcast %c96_i32_19 : i32 to vector<1x128xi32>
    %83 = arith.cmpi sge, %11, %82 : vector<1x128xi32>
    %c128_i32 = arith.constant 128 : i32
    %84 = vector.broadcast %c128_i32 : i32 to vector<1x128xi32>
    %85 = arith.cmpi slt, %11, %84 : vector<1x128xi32>
    %86 = arith.andi %83, %85 : vector<1x128xi1>
    %cst_20 = arith.constant 0.000000e+00 : f32
    %87 = vector.shape_cast %86 : vector<1x128xi1> to vector<1x128xi1>
    %88 = vector.broadcast %87 : vector<1x128xi1> to vector<4x128xi1>
    %89 = vector.broadcast %cst_20 : f32 to vector<4x128xf32>
    %90 = arith.select %88, %9, %89 : vector<4x128xi1>, vector<4x128xf32>
    %cst_21 = arith.constant dense<0.000000e+00> : vector<4xf32>
    %91 = vector.multi_reduction <add>, %90, %cst_21 [1] : vector<4x128xf32> to vector<4xf32>
    %92 = vector.shape_cast %91 : vector<4xf32> to vector<4x1xf32>
    %93 = vector.broadcast %4 : f32 to vector<4x1xf32>
    %94 = arith.addf %92, %93 : vector<4x1xf32>
    %95 = arith.negf %94 : vector<4x1xf32>
    %96 = math.exp %95 : vector<4x1xf32>
    %cst_22 = arith.constant 1.000000e+00 : f32
    %97 = vector.broadcast %cst_22 : f32 to vector<4x1xf32>
    %98 = arith.addf %97, %96 : vector<4x1xf32>
    %99 = arith.divf %97, %98 : vector<4x1xf32>
    %100 = vector.shape_cast %86 : vector<1x128xi1> to vector<1x128xi1>
    %101 = vector.broadcast %100 : vector<1x128xi1> to vector<4x128xi1>
    %102 = vector.shape_cast %99 : vector<4x1xf32> to vector<4x1xf32>
    %103 = vector.broadcast %102 : vector<4x1xf32> to vector<4x128xf32>
    %104 = arith.select %101, %103, %81 : vector<4x128xi1>, vector<4x128xf32>
    %105 = arith.mulf %104, %10 : vector<4x128xf32>
    %106 = arith.addf %1, %105 : vector<4x128xf32>
    %c0_23 = arith.constant 0 : index
    %c0_24 = arith.constant 0 : index
    %107 = vector.load %arg6[%c0_23, %c0_24] : memref<4x128xf32, #tpu.memory_space<vmem>>, vector<4x128xf32>
    tpu.vector_store %arg6[%c0_23, %c0_24], %106 {strides = array<i32>} : memref<4x128xf32, #tpu.memory_space<vmem>>, vector<4x128xf32>,
    return
  }
  func.func @transform_0(%arg0: i32) -> (i32, i32) {
    %c0_i32 = arith.constant 0 : i32
    %c0_i32_0 = arith.constant 0 : i32
    return %arg0, %c0_i32 : i32, i32
  }
  func.func @transform_1(%arg0: i32) -> (i32, i32) {
    %c0_i32 = arith.constant 0 : i32
    %c0_i32_0 = arith.constant 0 : i32
    return %arg0, %c0_i32 : i32, i32
  }
  func.func @transform_2(%arg0: i32) -> (i32, i32) {
    %c0_i32 = arith.constant 0 : i32
    %c0_i32_0 = arith.constant 0 : i32
    %c0_i32_1 = arith.constant 0 : i32
    return %c0_i32, %c0_i32_0 : i32, i32
  }
  func.func @transform_3(%arg0: i32) -> (i32, i32) {
    %c0_i32 = arith.constant 0 : i32
    %c0_i32_0 = arith.constant 0 : i32
    %c0_i32_1 = arith.constant 0 : i32
    return %c0_i32, %c0_i32_0 : i32, i32
  }
  func.func @transform_4(%arg0: i32) -> i32 {
    %c0_i32 = arith.constant 0 : i32
    %c0_i32_0 = arith.constant 0 : i32
    return %c0_i32 : i32
  }
  func.func @transform_5(%arg0: i32) -> (i32, i32) {
    %c0_i32 = arith.constant 0 : i32
    %c0_i32_0 = arith.constant 0 : i32
    return %arg0, %c0_i32 : i32, i32
  }
}

</mosaic_0001>

<llo_original>
// kernel: tpu_custom_call.1
$region0: #{tpu_custom_call.1}
  #allocation0 [shape = 'u32[]', space=smem, size = 0x4, offset = 0x4, fixed_abs, tag = 'smem constant byte address 0x4 - core index']
  #allocation1 [shape = 'u32[144,128]{1,0:T(1,128)}', space=vmem, size = 0x12000, scoped, tag = 'internal scratch']
  #allocation2 [shape = 'f32[1]{0:T(128)S(6)}', space=smem, size = 0x200, scoped, tag = 'scoped memory for tpu_custom_call.1']
  %s0 = inlined_call_operand.hbm [shape: f32[4,128], index: 0, kind: input, shape index: {}]
  %s1 = inlined_call_operand.hbm [shape: f32[4,128], index: 1, kind: input, shape index: {}]
  %s2 = inlined_call_operand.vmem [shape: f32[1,128], index: 2, kind: input, shape index: {}]
  %s3 = inlined_call_operand.vmem [shape: f32[1,128], index: 3, kind: input, shape index: {}]
  %s4 = inlined_call_operand.<no memory space> [shape: f32[1], index: 4, kind: input, shape index: {}]
  %s5 = inlined_call_operand.hbm [shape: f32[4,128], index: 5, kind: output, shape index: {}]
  %s6 = sld [smem:[#allocation0]]
  $region38: #{tpu_custom_call.1} parent=0
    _
  %s8 = ssub.s32 1, %s6
  %s9 = scalar_select 0, %s8, %s6
  %10 = sst [smem:[#allocation2]] %s4
  $region1: #{tpu_custom_call.1} parent=0
    #allocation3 [shape = 'u8[2048]{0}', space=vmem, size = 0x800, scoped, tag = 'input window, operand 0, single buffered']
    #allocation4 [shape = 's32[1]{0}', space=sflag, size = 0x4, scoped, tag = 'scoped memory for tpu_custom_call.1']
    #allocation5 [shape = 's32[1]{0}', space=sflag, size = 0x4, scoped, tag = 'scoped memory for tpu_custom_call.1']
    #allocation6 [shape = 'u8[2048]{0}', space=vmem, size = 0x800, scoped, tag = 'input window, operand 1, single buffered']
    #allocation7 [shape = 's32[1]{0}', space=sflag, size = 0x4, scoped, tag = 'scoped memory for tpu_custom_call.1']
    #allocation8 [shape = 'u8[2048]{0}', space=vmem, size = 0x800, scoped, tag = 'output window, operand 0, single buffered']
    %11 = vsyncpa [#allocation4], 0
    %12 = vsyncpa [#allocation7], 0
    %13 = vsyncpa [#allocation5], 0
    // Predicated region
    $region2: #{tpu_custom_call.1} parent=1 // pred_check
      _
    $region3: #{tpu_custom_call.1} parent=1 // pred_check_branch
      %15 = sbr.rel (0) target = $region5
    $region4: #{tpu_custom_call.1} parent=1 // pred_region
      %s17 = ssub.s32 64, 64
      %18 = vsyncadd [#allocation4], %s17
      %s20 = sshll.u32 [#allocation3], 4
      %s21 = int_to_ptr.vmem [resolvable:$true] %s20
      %23 = dma.hbm_to_vmem [thread:$0]  %s0, 64, %s21, [#allocation4]
    $region5: #{tpu_custom_call.1} parent=1 // pred_fallthru
      _
    // Predicated region
    $region6: #{tpu_custom_call.1} parent=1 // pred_check
      _
    $region7: #{tpu_custom_call.1} parent=1 // pred_check_branch
      %25 = sbr.rel (0) target = $region9
    $region8: #{tpu_custom_call.1} parent=1 // pred_region
      %s27 = ssub.s32 64, 64
      %28 = vsyncadd [#allocation7], %s27
      %s30 = sshll.u32 [#allocation6], 4
      %s31 = int_to_ptr.vmem [resolvable:$true] %s30
      %33 = dma.hbm_to_vmem [thread:$0]  %s1, 64, %s31, [#allocation7]
    $region9: #{tpu_custom_call.1} parent=1 // pred_fallthru
      _
    // Predicated region
    $region10: #{tpu_custom_call.1} parent=1 // pred_check
      _
    $region11: #{tpu_custom_call.1} parent=1 // pred_check_branch
      %35 = sbr.rel (0) target = $region13
    $region12: #{tpu_custom_call.1} parent=1 // pred_region
      _
    $region13: #{tpu_custom_call.1} parent=1 // pred_fallthru
      _
    // Predicated region
    $region14: #{tpu_custom_call.1} parent=1 // pred_check
      _
    $region15: #{tpu_custom_call.1} parent=1 // pred_check_branch
      %37 = sbr.rel (0) target = $region17
    $region16: #{tpu_custom_call.1} parent=1 // pred_region
      _
    $region17: #{tpu_custom_call.1} parent=1 // pred_fallthru
      _
    // Predicated region
    $region18: #{tpu_custom_call.1} parent=1 // pred_check
      _
    $region19: #{tpu_custom_call.1} parent=1 // pred_check_branch
      %39 = sbr.rel (0) target = $region21
    $region20: #{tpu_custom_call.1} parent=1 // pred_region
      _
    $region21: #{tpu_custom_call.1} parent=1 // pred_fallthru
      _
    // Predicated region
    $region22: #{tpu_custom_call.1} parent=1 // pred_check
      _
    $region23: #{tpu_custom_call.1} parent=1 // pred_check_branch
      %41 = sbr.rel (0) target = $region25
    $region24: #{tpu_custom_call.1} parent=1 // pred_region
      %42 = dma.done [#allocation4], 64
    $region25: #{tpu_custom_call.1} parent=1 // pred_fallthru
      _
    // Predicated region
    $region26: #{tpu_custom_call.1} parent=1 // pred_check
      _
    $region27: #{tpu_custom_call.1} parent=1 // pred_check_branch
      %44 = sbr.rel (0) target = $region29
    $region28: #{tpu_custom_call.1} parent=1 // pred_region
      %45 = dma.done [#allocation7], 64
    $region29: #{tpu_custom_call.1} parent=1 // pred_fallthru
      _
    %v46 = vld [vmem:[#allocation3] sm:$0xf]
    %v47 = vld [vmem:[#allocation6] sm:$0xf]
    %v48 = vld [vmem:[%s2] sm:$0x1]
    %v49 = vld [vmem:[%s3] sm:$0x1]
    %s50 = sld [smem:[#allocation2]]
    %v52 = vlaneseq
    %v53 = vshrl.u32 %v52, 7
    %v54 = vsub.s32 0, %v53
    %v55 = vrot.slane %v48, %v54
    %v57 = vmul.f32 %v46, %v55
    %v59 = vlaneseq
    %v60 = vshrl.u32 %v59, 7
    %v61 = vsub.s32 0, %v60
    %v62 = vrot.slane %v49, %v61
    %v64 = vmul.f32 %v47, %v62
    %v65 = vadd.f32 %v57, %v64
    %v66 = vsub.f32 %v46, %v47
    %v67 = vlaneseq
    %v68 = vand.u32 %v67, 127
    %vm69 = vcmp.ge.s32.totalorder %v68, 0
    %vm70 = vcmp.lt.s32.totalorder %v68, 32
    %vm71 = vmand %vm69, %vm70
    %v72 = vsel %vm71, 1, 0
    %vm73 = vcmp.eq.s32.totalorder %v72, 1
    %v74 = vsel %vm73, %v65, 0.0
    %vm75 = vcmask 1043456
    %v76 = vsel %vm75, %v74, 0.0
    %77 = vadd.xlane.f32.xlu0 %v76
    %v78 = vpop.xlane.xlu0 %77
    %v79 = vstv %s50
    %v80 = vadd.f32 %v78, %v79
    %v81 = vxor.u32 %v80, 2147483648
    %v82 = vmul.f32 %v81, 1.442695
    %v83 = vpow.pop %v82
    %v84 = vadd.f32 %v83, 1.0
    %v85 = vrcp.pop %v84
    %v86 = vmul.f32 1.0, %v85
    %v87 = vsel %vm73, %v86, 0.0
    %vm88 = vcmp.ge.s32.totalorder %v68, 32
    %vm89 = vcmp.lt.s32.totalorder %v68, 64
    %vm90 = vmand %vm88, %vm89
    %v91 = vsel %vm90, 1, 0
    %vm92 = vcmp.eq.s32.totalorder %v91, 1
    %v93 = vsel %vm92, %v65, 0.0
    %v94 = vsel %vm75, %v93, 0.0
    %95 = vadd.xlane.f32.xlu0 %v94
    %v96 = vpop.xlane.xlu0 %95
    %v97 = vadd.f32 %v96, %v79
    %v98 = vxor.u32 %v97, 2147483648
    %v99 = vmul.f32 %v98, 1.442695
    %v100 = vpow.pop %v99
    %v101 = vadd.f32 %v100, 1.0
    %v102 = vrcp.pop %v101
    %v103 = vmul.f32 1.0, %v102
    %v104 = vsel %vm92, %v103, %v87
    %vm105 = vcmp.ge.s32.totalorder %v68, 64
    %vm106 = vcmp.lt.s32.totalorder %v68, 96
    %vm107 = vmand %vm105, %vm106
    %v108 = vsel %vm107, 1, 0
    %vm109 = vcmp.eq.s32.totalorder %v108, 1
    %v110 = vsel %vm109, %v65, 0.0
    %v111 = vsel %vm75, %v110, 0.0
    %112 = vadd.xlane.f32.xlu0 %v111
    %v113 = vpop.xlane.xlu0 %112
    %v114 = vadd.f32 %v113, %v79
    %v115 = vxor.u32 %v114, 2147483648
    %v116 = vmul.f32 %v115, 1.442695
    %v117 = vpow.pop %v116
    %v118 = vadd.f32 %v117, 1.0
    %v119 = vrcp.pop %v118
    %v120 = vmul.f32 1.0, %v119
    %v121 = vsel %vm109, %v120, %v104
    %vm122 = vcmp.ge.s32.totalorder %v68, 96
    %vm123 = vcmp.lt.s32.totalorder %v68, 128
    %vm124 = vmand %vm122, %vm123
    %v125 = vsel %vm124, 1, 0
    %vm126 = vcmp.eq.s32.totalorder %v125, 1
    %v127 = vsel %vm126, %v65, 0.0
    %v128 = vsel %vm75, %v127, 0.0
    %129 = vadd.xlane.f32.xlu0 %v128
    %v130 = vpop.xlane.xlu0 %129
    %v131 = vadd.f32 %v130, %v79
    %v132 = vxor.u32 %v131, 2147483648
    %v133 = vmul.f32 %v132, 1.442695
    %v134 = vpow.pop %v133
    %v135 = vadd.f32 %v134, 1.0
    %v136 = vrcp.pop %v135
    %v137 = vmul.f32 1.0, %v136
    %v138 = vsel %vm126, %v137, %v121
    %v139 = vmul.f32 %v138, %v66
    %v140 = vadd.f32 %v47, %v139
    %141 = vst [vmem:[#allocation8] sm:$0xf] %v140
    // Predicated region
    $region30: #{tpu_custom_call.1} parent=1 // pred_check
      _
    $region31: #{tpu_custom_call.1} parent=1 // pred_check_branch
      %143 = sbr.rel (0) target = $region33
    $region32: #{tpu_custom_call.1} parent=1 // pred_region
      %s145 = ssub.s32 64, 64
      %146 = vsyncadd [#allocation5], %s145
      %s148 = sshll.u32 [#allocation8], 4
      %s149 = int_to_ptr.vmem [resolvable:$true] %s148
      %151 = dma.vmem_to_hbm [thread:$0]  %s149, 64, %s5, [#allocation5]
    $region33: #{tpu_custom_call.1} parent=1 // pred_fallthru
      _
    // Predicated region
    $region34: #{tpu_custom_call.1} parent=1 // pred_check
      _
    $region35: #{tpu_custom_call.1} parent=1 // pred_check_branch
      %153 = sbr.rel (0) target = $region37
    $region36: #{tpu_custom_call.1} parent=1 // pred_region
      %154 = dma.done [#allocation5], 64
    $region37: #{tpu_custom_call.1} parent=1 // pred_fallthru
      _
    %155 = vsyncpa [#allocation4], 1
    %156 = vsyncpa [#allocation7], 1
    %157 = vsyncpa [#allocation5], 1

</llo_original>
